<compile_context>
chip_gen: v7x
topology: tpu7x:2x2x1
jax: 0.10.0
libtpu: 0.0.40
codegen_flags: <defaults>
</compile_context>

<pallas_src>
import jax
import jax.numpy as jnp
from jax.experimental import pallas as pl
from jax.experimental.pallas import tpu as pltpu


def _round_up(a: int, b: int) -> int:
    return (a + b - 1) // b * b


def recon_dnn_kernel(x_ref, w1_ref, b1_ref, w2_ref, b2_ref, o_ref):
    # x_ref : (tm, hidden)         VMEM tile of the batch (compute dtype)
    # w1_ref: (hidden, hidden2)    full weight, [in, out] layout (compute dtype)
    # b1_ref: (1, hidden2)         f32
    # w2_ref: (hidden2, f_pad)     full weight, lane-padded (compute dtype)
    # b2_ref: (1, f_pad)           f32
    # o_ref : (tm, f_pad)
    h = jnp.dot(x_ref[...], w1_ref[...], preferred_element_type=jnp.float32)
    h = jnp.maximum(h + b1_ref[...], 0.0)            # bias + ReLU in f32 (VPU)
    out = jnp.dot(h.astype(w2_ref.dtype), w2_ref[...],
                  preferred_element_type=jnp.float32)
    o_ref[...] = (out + b2_ref[...]).astype(o_ref.dtype)


def recon_dnn_forward(x, w1, b1, w2, b2, *, tm=256,
                      compute_dtype=jnp.bfloat16, vmem_limit_bytes=None):
    """ReconDNN forward.

    x : [N, hidden]          input embeddings
    w1: [hidden, hidden2]    (transposed vs. nn.Linear.weight)
    b1: [hidden2]
    w2: [hidden2, feature]   (transposed vs. nn.Linear.weight)
    b2: [feature]
    returns [N, feature] in x.dtype
    """
    N, hidden = x.shape
    hidden2 = w1.shape[1]
    feature = w2.shape[1]
    out_dtype = x.dtype

    # Batch tile: big enough to feed the MXU (default 256 rows, a multiple of
    # both 128 and 256), but never larger than the 8-aligned batch so small
    # problems collapse to a single grid step.
    tm_eff = min(tm, _round_up(N, 8))
    n_pad = _round_up(N, tm_eff)

    # Lane-dense output: pad feature up to a multiple of 128.
    f_pad = _round_up(feature, 128)

    xp = x if n_pad == N else jnp.pad(x, ((0, n_pad - N), (0, 0)))
    xp = xp.astype(compute_dtype)

    w1c = w1.astype(compute_dtype)
    w2c = w2.astype(compute_dtype)
    b2p = b2
    if f_pad != feature:
        w2c = jnp.pad(w2c, ((0, 0), (0, f_pad - feature)))
        b2p = jnp.pad(b2, (0, f_pad - feature))
    b1_2d = b1.astype(jnp.float32).reshape(1, hidden2)
    b2_2d = b2p.astype(jnp.float32).reshape(1, f_pad)

    grid = (n_pad // tm_eff,)

    cp_kwargs = dict(dimension_semantics=("parallel",))
    if vmem_limit_bytes is not None:
        cp_kwargs["vmem_limit_bytes"] = vmem_limit_bytes

    out = pl.pallas_call(
        recon_dnn_kernel,
        out_shape=jax.ShapeDtypeStruct((n_pad, f_pad), out_dtype),
        grid_spec=pltpu.PrefetchScalarGridSpec(
            num_scalar_prefetch=0,
            grid=grid,
            in_specs=[
                pl.BlockSpec((tm_eff, hidden), lambda i: (i, 0)),     # x tile
                pl.BlockSpec((hidden, hidden2), lambda i: (0, 0)),    # w1 (whole)
                pl.BlockSpec((1, hidden2), lambda i: (0, 0)),         # b1
                pl.BlockSpec((hidden2, f_pad), lambda i: (0, 0)),     # w2 (whole)
                pl.BlockSpec((1, f_pad), lambda i: (0, 0)),           # b2
            ],
            out_specs=pl.BlockSpec((tm_eff, f_pad), lambda i: (i, 0)),
        ),
        compiler_params=pltpu.CompilerParams(**cp_kwargs),
    )(xp, w1c, b1_2d, w2c, b2_2d)

    return out[:N, :feature]


if __name__ == "__main__":
    # Small shapes consistent with ReconDNN(hidden_size, feature_size, hidden_size2=512)
    N = 16            # batch (number of embeddings)
    hidden_size = 32  # input embedding dim
    hidden_size2 = 512
    feature_size = 64

    key = jax.random.PRNGKey(0)
    kx, kw1, kb1, kw2, kb2, kx2 = jax.random.split(key, 6)

    x = jax.random.normal(kx, (N, hidden_size), dtype=jnp.float32)

    # Deterministic PyTorch-like init, stored directly in [in, out] layout.
    lim1 = 1.0 / jnp.sqrt(hidden_size)
    w1 = jax.random.uniform(kw1, (hidden_size, hidden_size2),
                            minval=-lim1, maxval=lim1, dtype=jnp.float32)
    b1 = jax.random.uniform(kb1, (hidden_size2,),
                            minval=-lim1, maxval=lim1, dtype=jnp.float32)
    lim2 = 1.0 / jnp.sqrt(hidden_size2)
    w2 = jax.random.uniform(kw2, (hidden_size2, feature_size),
                            minval=-lim2, maxval=lim2, dtype=jnp.float32)
    b2 = jax.random.uniform(kb2, (feature_size,),
                            minval=-lim2, maxval=lim2, dtype=jnp.float32)

    ref = jnp.maximum(x @ w1 + b1, 0.0) @ w2 + b2

    # 1) f32 compute path: exact vs. reference (tiny batch -> single grid step).
    out_f32 = recon_dnn_forward(x, w1, b1, w2, b2, compute_dtype=jnp.float32)
    out_f32 = jax.block_until_ready(out_f32)
    assert out_f32.shape == (N, feature_size)
    assert jnp.allclose(out_f32, ref, atol=1e-5, rtol=1e-5), "f32 mismatch vs. reference"

    # 2) Default bf16 MXU path (perf-recommended on v6e/v7x): relaxed tolerance.
    out_bf16 = recon_dnn_forward(x, w1, b1, w2, b2)
    out_bf16 = jax.block_until_ready(out_bf16)
    assert jnp.allclose(out_bf16, ref, atol=5e-2, rtol=5e-2), "bf16 mismatch vs. reference"

    # 3) Exercise the padded multi-step grid path (batch not a tile multiple).
    N2 = 300
    x2 = jax.random.normal(kx2, (N2, hidden_size), dtype=jnp.float32)
    ref2 = jnp.maximum(x2 @ w1 + b1, 0.0) @ w2 + b2
    out2 = recon_dnn_forward(x2, w1, b1, w2, b2, tm=128, compute_dtype=jnp.float32)
    out2 = jax.block_until_ready(out2)
    assert out2.shape == (N2, feature_size)
    assert jnp.allclose(out2, ref2, atol=1e-5, rtol=1e-5), "padded-grid mismatch vs. reference"

    print("KERNEL_OK")
</pallas_src>

<mosaic_0001>
module attributes {stable_mosaic.version = 11 : i64} {
  func.func @recon_dnn_kernel(%arg0: i32, %arg1: memref<16x32xf32, #tpu.memory_space<vmem>>, %arg2: memref<32x512xf32, #tpu.memory_space<vmem>>, %arg3: memref<1x512xf32, #tpu.memory_space<vmem>>, %arg4: memref<512x128xf32, #tpu.memory_space<vmem>>, %arg5: memref<1x128xf32, #tpu.memory_space<vmem>>, %arg6: memref<16x128xf32, #tpu.memory_space<vmem>>) attributes {dimension_semantics = [#tpu.dimension_semantics<parallel>], iteration_bounds = array<i64: 1>, scalar_prefetch = 0 : i64, scratch_operands = 0 : i64, tpu.core_type = #tpu.core_type<tc>, window_params = [{transform_indices = @transform_0, window_bounds = array<i64: 16, 32>}, {pipeline_mode = #tpu.pipeline_mode<synchronous>, transform_indices = @transform_1, window_bounds = array<i64: 32, 512>}, {pipeline_mode = #tpu.pipeline_mode<synchronous>, transform_indices = @transform_2, window_bounds = array<i64: 1, 512>}, {pipeline_mode = #tpu.pipeline_mode<synchronous>, transform_indices = @transform_3, window_bounds = array<i64: 512, 128>}, {pipeline_mode = #tpu.pipeline_mode<synchronous>, transform_indices = @transform_4, window_bounds = array<i64: 1, 128>}, {transform_indices = @transform_5, window_bounds = array<i64: 16, 128>}]} {
    %c0 = arith.constant 0 : index
    %c0_0 = arith.constant 0 : index
    %0 = vector.load %arg1[%c0, %c0_0] : memref<16x32xf32, #tpu.memory_space<vmem>>, vector<16x32xf32>
    %c0_1 = arith.constant 0 : index
    %c0_2 = arith.constant 0 : index
    %1 = vector.load %arg2[%c0_1, %c0_2] : memref<32x512xf32, #tpu.memory_space<vmem>>, vector<32x512xf32>
    %cst = arith.constant dense<0.000000e+00> : vector<16x512xf32>
    %2 = tpu.matmul %0, %1, %cst {dimension_numbers = #tpu.dot_dimension_numbers<[1], [0], [0], [1], [0, 0, 1, 1], [], []>} : vector<16x32xf32>, vector<32x512xf32>, vector<16x512xf32> -> vector<16x512xf32>
    %c0_3 = arith.constant 0 : index
    %c0_4 = arith.constant 0 : index
    %3 = vector.load %arg3[%c0_3, %c0_4] : memref<1x512xf32, #tpu.memory_space<vmem>>, vector<1x512xf32>
    %4 = vector.broadcast %3 : vector<1x512xf32> to vector<16x512xf32>
    %5 = arith.addf %2, %4 : vector<16x512xf32>
    %cst_5 = arith.constant 0.000000e+00 : f32
    %6 = vector.broadcast %cst_5 : f32 to vector<16x512xf32>
    %7 = arith.maximumf %5, %6 : vector<16x512xf32>
    %c0_6 = arith.constant 0 : index
    %c0_7 = arith.constant 0 : index
    %8 = vector.load %arg4[%c0_6, %c0_7] : memref<512x128xf32, #tpu.memory_space<vmem>>, vector<512x128xf32>
    %cst_8 = arith.constant dense<0.000000e+00> : vector<16x128xf32>
    %9 = tpu.matmul %7, %8, %cst_8 {dimension_numbers = #tpu.dot_dimension_numbers<[1], [0], [0], [1], [0, 0, 1, 1], [], []>} : vector<16x512xf32>, vector<512x128xf32>, vector<16x128xf32> -> vector<16x128xf32>
    %c0_9 = arith.constant 0 : index
    %c0_10 = arith.constant 0 : index
    %10 = vector.load %arg5[%c0_9, %c0_10] : memref<1x128xf32, #tpu.memory_space<vmem>>, vector<1x128xf32>
    %11 = vector.broadcast %10 : vector<1x128xf32> to vector<16x128xf32>
    %12 = arith.addf %9, %11 : vector<16x128xf32>
    %c0_11 = arith.constant 0 : index
    %c0_12 = arith.constant 0 : index
    %13 = vector.load %arg6[%c0_11, %c0_12] : memref<16x128xf32, #tpu.memory_space<vmem>>, vector<16x128xf32>
    tpu.vector_store %arg6[%c0_11, %c0_12], %12 {strides = array<i32>} : memref<16x128xf32, #tpu.memory_space<vmem>>, vector<16x128xf32>,
    return
  }
  func.func @transform_0(%arg0: i32) -> (i32, i32) {
    %c0_i32 = arith.constant 0 : i32
    %c0_i32_0 = arith.constant 0 : i32
    return %arg0, %c0_i32 : i32, i32
  }
  func.func @transform_1(%arg0: i32) -> (i32, i32) {
    %c0_i32 = arith.constant 0 : i32
    %c0_i32_0 = arith.constant 0 : i32
    %c0_i32_1 = arith.constant 0 : i32
    return %c0_i32, %c0_i32_0 : i32, i32
  }
  func.func @transform_2(%arg0: i32) -> (i32, i32) {
    %c0_i32 = arith.constant 0 : i32
    %c0_i32_0 = arith.constant 0 : i32
    %c0_i32_1 = arith.constant 0 : i32
    return %c0_i32, %c0_i32_0 : i32, i32
  }
  func.func @transform_3(%arg0: i32) -> (i32, i32) {
    %c0_i32 = arith.constant 0 : i32
    %c0_i32_0 = arith.constant 0 : i32
    %c0_i32_1 = arith.constant 0 : i32
    return %c0_i32, %c0_i32_0 : i32, i32
  }
  func.func @transform_4(%arg0: i32) -> (i32, i32) {
    %c0_i32 = arith.constant 0 : i32
    %c0_i32_0 = arith.constant 0 : i32
    %c0_i32_1 = arith.constant 0 : i32
    return %c0_i32, %c0_i32_0 : i32, i32
  }
  func.func @transform_5(%arg0: i32) -> (i32, i32) {
    %c0_i32 = arith.constant 0 : i32
    %c0_i32_0 = arith.constant 0 : i32
    return %arg0, %c0_i32 : i32, i32
  }
}

</mosaic_0001>

<llo_original>
// kernel: tpu_custom_call.1
$region0: #{tpu_custom_call.1}
  #allocation0 [shape = 'u32[]', space=smem, size = 0x4, offset = 0x4, fixed_abs, tag = 'smem constant byte address 0x4 - core index']
  #allocation1 [shape = 'u32[144,128]{1,0:T(1,128)}', space=vmem, size = 0x12000, scoped, tag = 'internal scratch']
  %s0 = inlined_call_operand.hbm [shape: f32[16,32], index: 0, kind: input, shape index: {}]
  %s1 = inlined_call_operand.hbm [shape: f32[32,512], index: 1, kind: input, shape index: {}]
  %s2 = inlined_call_operand.vmem [shape: f32[1,512], index: 2, kind: input, shape index: {}]
  %s3 = inlined_call_operand.hbm [shape: f32[512,128], index: 3, kind: input, shape index: {}]
  %s4 = inlined_call_operand.vmem [shape: f32[1,128], index: 4, kind: input, shape index: {}]
  %s5 = inlined_call_operand.hbm [shape: f32[16,128], index: 5, kind: output, shape index: {}]
  %s6 = sld [smem:[#allocation0]]
  $region42: #{tpu_custom_call.1} parent=0
    _
  %s8 = ssub.s32 1, %s6
  %s9 = scalar_select 0, %s8, %s6
  $region1: #{tpu_custom_call.1} parent=0
    #allocation2 [shape = 'u8[8192]{0}', space=vmem, size = 0x2000, scoped, tag = 'input window, operand 0, single buffered']
    #allocation3 [shape = 's32[1]{0}', space=sflag, size = 0x4, scoped, tag = 'scoped memory for tpu_custom_call.1']
    #allocation4 [shape = 's32[1]{0}', space=sflag, size = 0x4, scoped, tag = 'scoped memory for tpu_custom_call.1']
    #allocation5 [shape = 'u8[65536]{0}', space=vmem, size = 0x10000, scoped, tag = 'input window, operand 1, single buffered']
    #allocation6 [shape = 's32[1]{0}', space=sflag, size = 0x4, scoped, tag = 'scoped memory for tpu_custom_call.1']
    #allocation7 [shape = 'u8[262144]{0}', space=vmem, size = 0x40000, scoped, tag = 'input window, operand 3, single buffered']
    #allocation8 [shape = 'u8[8192]{0}', space=vmem, size = 0x2000, scoped, tag = 'output window, operand 0, single buffered']
    %10 = vsyncpa [#allocation3], 0
    %11 = vsyncpa [#allocation6], 0
    %12 = vsyncpa [#allocation4], 0
    // Predicated region
    $region2: #{tpu_custom_call.1} parent=1 // pred_check
      _
    $region3: #{tpu_custom_call.1} parent=1 // pred_check_branch
      %14 = sbr.rel (0) target = $region5
    $region4: #{tpu_custom_call.1} parent=1 // pred_region
      %s16 = ssub.s32 256, 256
      %17 = vsyncadd [#allocation3], %s16
      %s18 = sshll.u32 [#allocation2], 4
      %s19 = int_to_ptr.vmem [resolvable:$true] %s18
      %24 = dma.hbm_to_vmem [thread:$0]  %s0, 256, %s19, [#allocation3], 128, 128, 8
    $region5: #{tpu_custom_call.1} parent=1 // pred_fallthru
      _
    // Predicated region
    $region6: #{tpu_custom_call.1} parent=1 // pred_check
      _
    $region7: #{tpu_custom_call.1} parent=1 // pred_check_branch
      %26 = sbr.rel (0) target = $region9
    $region8: #{tpu_custom_call.1} parent=1 // pred_region
      %s28 = ssub.s32 2048, 2048
      %29 = vsyncadd [#allocation6], %s28
      %s30 = sshll.u32 [#allocation5], 4
      %s31 = int_to_ptr.vmem [resolvable:$true] %s30
      %36 = dma.hbm_to_vmem [thread:$0]  %s1, 2048, %s31, [#allocation6], 512, 512, 32
    $region9: #{tpu_custom_call.1} parent=1 // pred_fallthru
      _
    // Predicated region
    $region10: #{tpu_custom_call.1} parent=1 // pred_check
      _
    $region11: #{tpu_custom_call.1} parent=1 // pred_check_branch
      %38 = sbr.rel (0) target = $region13
    $region12: #{tpu_custom_call.1} parent=1 // pred_region
      _
    $region13: #{tpu_custom_call.1} parent=1 // pred_fallthru
      _
    // Predicated region
    $region14: #{tpu_custom_call.1} parent=1 // pred_check
      _
    $region15: #{tpu_custom_call.1} parent=1 // pred_check_branch
      %40 = sbr.rel (0) target = $region17
    $region16: #{tpu_custom_call.1} parent=1 // pred_region
      %s42 = ssub.s32 8192, 8192
      %43 = vsyncadd [#allocation6], %s42
      %s44 = sshll.u32 [#allocation7], 4
      %s45 = int_to_ptr.vmem [resolvable:$true] %s44
      %50 = dma.hbm_to_vmem [thread:$0]  %s3, 8192, %s45, [#allocation6], 128, 128, 8
    $region17: #{tpu_custom_call.1} parent=1 // pred_fallthru
      _
    // Predicated region
    $region18: #{tpu_custom_call.1} parent=1 // pred_check
      _
    $region19: #{tpu_custom_call.1} parent=1 // pred_check_branch
      %52 = sbr.rel (0) target = $region21
    $region20: #{tpu_custom_call.1} parent=1 // pred_region
      _
    $region21: #{tpu_custom_call.1} parent=1 // pred_fallthru
      _
    // Predicated region
    $region22: #{tpu_custom_call.1} parent=1 // pred_check
      _
    $region23: #{tpu_custom_call.1} parent=1 // pred_check_branch
      %54 = sbr.rel (0) target = $region25
    $region24: #{tpu_custom_call.1} parent=1 // pred_region
      %55 = dma.done [#allocation3], 256
    $region25: #{tpu_custom_call.1} parent=1 // pred_fallthru
      _
    // Predicated region
    $region26: #{tpu_custom_call.1} parent=1 // pred_check
      _
    $region27: #{tpu_custom_call.1} parent=1 // pred_check_branch
      %57 = sbr.rel (0) target = $region29
    $region28: #{tpu_custom_call.1} parent=1 // pred_region
      %58 = dma.done [#allocation6], 2048
    $region29: #{tpu_custom_call.1} parent=1 // pred_fallthru
      _
    // Predicated region
    $region30: #{tpu_custom_call.1} parent=1 // pred_check
      _
    $region31: #{tpu_custom_call.1} parent=1 // pred_check_branch
      %60 = sbr.rel (0) target = $region33
    $region32: #{tpu_custom_call.1} parent=1 // pred_region
      %61 = dma.done [#allocation6], 8192
    $region33: #{tpu_custom_call.1} parent=1 // pred_fallthru
      _
    %v62 = vld [vmem:[#allocation2] sm:$0xff]
    %v63 = vld [vmem:[#allocation2 + $0x8] sm:$0xff]
    %v64 = vld [vmem:[#allocation5] sm:$0xff]
    %v65 = vld [vmem:[#allocation5 + $0x8] sm:$0xff]
    %v66 = vld [vmem:[#allocation5 + $0x10] sm:$0xff]
    %v67 = vld [vmem:[#allocation5 + $0x18] sm:$0xff]
    %v68 = vld [vmem:[#allocation5 + $0x20] sm:$0xff]
    %v69 = vld [vmem:[#allocation5 + $0x28] sm:$0xff]
    %v70 = vld [vmem:[#allocation5 + $0x30] sm:$0xff]
    %v71 = vld [vmem:[#allocation5 + $0x38] sm:$0xff]
    %v72 = vld [vmem:[#allocation5 + $0x40] sm:$0xff]
    %v73 = vld [vmem:[#allocation5 + $0x48] sm:$0xff]
    %v74 = vld [vmem:[#allocation5 + $0x50] sm:$0xff]
    %v75 = vld [vmem:[#allocation5 + $0x58] sm:$0xff]
    %v76 = vld [vmem:[#allocation5 + $0x60] sm:$0xff]
    %v77 = vld [vmem:[#allocation5 + $0x68] sm:$0xff]
    %v78 = vld [vmem:[#allocation5 + $0x70] sm:$0xff]
    %v79 = vld [vmem:[#allocation5 + $0x78] sm:$0xff]
    %v80 = vld [vmem:[%s2] sm:$0xf]
    %v82 = vlaneseq
    %v83 = vshrl.u32 %v82, 7
    %v84 = vsub.s32 0, %v83
    %v85 = vrot.slane %v80, %v84
    %v86 = vlaneseq
    %v87 = vshrl.u32 %v86, 7
    %v88 = vsub.s32 1, %v87
    %v89 = vrot.slane %v80, %v88
    %v90 = vlaneseq
    %v91 = vshrl.u32 %v90, 7
    %v92 = vsub.s32 2, %v91
    %v93 = vrot.slane %v80, %v92
    %v94 = vlaneseq
    %v95 = vshrl.u32 %v94, 7
    %v96 = vsub.s32 3, %v95
    %v97 = vrot.slane %v80, %v96
    %vm102 = vcmask 261120
    %v104 = vsel %vm102, %v62, 0
    %v107 = vsel %vm102, %v63, 0
    %109 = vmatprep.subr.mxu0 %v65
    %110 = vmatpush1.msra.mxu0 %v64
    %111 = vmatprep.subr.mxu0 %v69
    %112 = vmatpush1.msra.mxu0 %v68
    %113 = vmatprep.subr.mxu0 %v73
    %114 = vmatpush1.msra.mxu0 %v72
    %115 = vmatprep.subr.mxu0 %v77
    %116 = vmatpush1.msra.mxu0 %v76
    %117 = vmatprep.subr.mxu0 0.0
    %118 = vmatpush1.msra.mxu0 0.0
    %119 = vmatprep.subr.mxu0 0.0
    %120 = vmatpush1.msra.mxu0 0.0
    %121 = vmatprep.subr.mxu0 0.0
    %122 = vmatpush1.msra.mxu0 0.0
    %123 = vmatprep.subr.mxu0 0.0
    %124 = vmatpush1.msra.mxu0 0.0
    %125 = vmatprep.subr.mxu0 0.0
    %126 = vmatpush1.msra.mxu0 0.0
    %127 = vmatprep.subr.mxu0 0.0
    %128 = vmatpush1.msra.mxu0 0.0
    %129 = vmatprep.subr.mxu0 0.0
    %130 = vmatpush1.msra.mxu0 0.0
    %131 = vmatprep.subr.mxu0 0.0
    %132 = vmatpush1.msra.mxu0 0.0
    %133 = vmatprep.subr.mxu0 0.0
    %134 = vmatpush1.msra.mxu0 0.0
    %135 = vmatprep.subr.mxu0 0.0
    %136 = vmatpush1.msra.mxu0 0.0
    %137 = vmatprep.subr.mxu0 0.0
    %138 = vmatpush1.msra.mxu0 0.0
    %139 = vmatprep.subr.mxu0 0.0
    %140 = vmatpush1.msra.mxu0 0.0
    %141 = vmatprep.subr.mxu0 0.0
    %142 = vmatpush1.msra.mxu0 0.0
    %143 = vmatprep.subr.mxu0 0.0
    %144 = vmatpush1.msra.mxu0 0.0
    %145 = vmatprep.subr.mxu0 0.0
    %146 = vmatpush1.msra.mxu0 0.0
    %147 = vmatprep.subr.mxu0 0.0
    %148 = vmatpush1.msra.mxu0 0.0
    %149 = vmatprep.subr.mxu0 0.0
    %150 = vmatpush1.msra.mxu0 0.0
    %151 = vmatprep.subr.mxu0 0.0
    %152 = vmatpush1.msra.mxu0 0.0
    %153 = vmatprep.subr.mxu0 0.0
    %154 = vmatpush1.msra.mxu0 0.0
    %155 = vmatprep.subr.mxu0 0.0
    %156 = vmatpush1.msra.mxu0 0.0
    %157 = vmatprep.subr.mxu0 0.0
    %158 = vmatpush1.msra.mxu0 0.0
    %159 = vmatprep.subr.mxu0 0.0
    %160 = vmatpush1.msra.mxu0 0.0
    %161 = vmatprep.subr.mxu0 0.0
    %162 = vmatpush1.msra.mxu0 0.0
    %163 = vmatprep.subr.mxu0 0.0
    %164 = vmatpush1.msra.mxu0 0.0
    %165 = vmatprep.subr.mxu0 0.0
    %166 = vmatpush1.msra.mxu0 0.0
    %167 = vmatprep.subr.mxu0 0.0
    %168 = vmatpush1.msra.mxu0 0.0
    %169 = vmatprep.subr.mxu0 0.0
    %170 = vmatpush1.msra.mxu0 0.0
    %171 = vmatprep.subr.mxu0 0.0
    %172 = vmatpush1.msra.mxu0 0.0
    %173 = vmatprep.mubr.f32.mxu0 0.0
    %174 = vmatmul.mubr.f32.gmra.mrb[0].mxu0 %v104
    %v175 = vpop.f32.mrb[0].mxu0
    %v176 = vadd.f32 %v85, %v175
    %v177 = vpop.f32.mrb[0].mxu0
    %v178 = vadd.f32 %v89, %v177
    %179 = vmatprep.mubr.f32.mxu0 0.0
    %180 = vmatmul.mubr.f32.gmra.mrb[0].mxu0 %v107
    %v181 = vpop.f32.mrb[0].mxu0
    %v182 = vadd.f32 %v85, %v181
    %v183 = vpop.f32.mrb[0].mxu0
    %v184 = vadd.f32 %v89, %v183
    %185 = vdwg.mxu0
    %186 = vmatprep.subr.mxu0 %v67
    %187 = vmatpush1.msra.mxu0 %v66
    %188 = vmatprep.subr.mxu0 %v71
    %189 = vmatpush1.msra.mxu0 %v70
    %190 = vmatprep.subr.mxu0 %v75
    %191 = vmatpush1.msra.mxu0 %v74
    %192 = vmatprep.subr.mxu0 %v79
    %193 = vmatpush1.msra.mxu0 %v78
    %194 = vmatprep.subr.mxu0 0.0
    %195 = vmatpush1.msra.mxu0 0.0
    %196 = vmatprep.subr.mxu0 0.0
    %197 = vmatpush1.msra.mxu0 0.0
    %198 = vmatprep.subr.mxu0 0.0
    %199 = vmatpush1.msra.mxu0 0.0
    %200 = vmatprep.subr.mxu0 0.0
    %201 = vmatpush1.msra.mxu0 0.0
    %202 = vmatprep.subr.mxu0 0.0
    %203 = vmatpush1.msra.mxu0 0.0
    %204 = vmatprep.subr.mxu0 0.0
    %205 = vmatpush1.msra.mxu0 0.0
    %206 = vmatprep.subr.mxu0 0.0
    %207 = vmatpush1.msra.mxu0 0.0
    %208 = vmatprep.subr.mxu0 0.0
    %209 = vmatpush1.msra.mxu0 0.0
    %210 = vmatprep.subr.mxu0 0.0
    %211 = vmatpush1.msra.mxu0 0.0
    %212 = vmatprep.subr.mxu0 0.0
    %213 = vmatpush1.msra.mxu0 0.0
    %214 = vmatprep.subr.mxu0 0.0
    %215 = vmatpush1.msra.mxu0 0.0
    %216 = vmatprep.subr.mxu0 0.0
    %217 = vmatpush1.msra.mxu0 0.0
    %218 = vmatprep.subr.mxu0 0.0
    %219 = vmatpush1.msra.mxu0 0.0
    %220 = vmatprep.subr.mxu0 0.0
    %221 = vmatpush1.msra.mxu0 0.0
    %222 = vmatprep.subr.mxu0 0.0
    %223 = vmatpush1.msra.mxu0 0.0
    %224 = vmatprep.subr.mxu0 0.0
    %225 = vmatpush1.msra.mxu0 0.0
    %226 = vmatprep.subr.mxu0 0.0
    %227 = vmatpush1.msra.mxu0 0.0
    %228 = vmatprep.subr.mxu0 0.0
    %229 = vmatpush1.msra.mxu0 0.0
    %230 = vmatprep.subr.mxu0 0.0
    %231 = vmatpush1.msra.mxu0 0.0
    %232 = vmatprep.subr.mxu0 0.0
    %233 = vmatpush1.msra.mxu0 0.0
    %234 = vmatprep.subr.mxu0 0.0
    %235 = vmatpush1.msra.mxu0 0.0
    %236 = vmatprep.subr.mxu0 0.0
    %237 = vmatpush1.msra.mxu0 0.0
    %238 = vmatprep.subr.mxu0 0.0
    %239 = vmatpush1.msra.mxu0 0.0
    %240 = vmatprep.subr.mxu0 0.0
    %241 = vmatpush1.msra.mxu0 0.0
    %242 = vmatprep.subr.mxu0 0.0
    %243 = vmatpush1.msra.mxu0 0.0
    %244 = vmatprep.subr.mxu0 0.0
    %245 = vmatpush1.msra.mxu0 0.0
    %246 = vmatprep.subr.mxu0 0.0
    %247 = vmatpush1.msra.mxu0 0.0
    %248 = vmatprep.subr.mxu0 0.0
    %249 = vmatpush1.msra.mxu0 0.0
    %250 = vmatprep.mubr.f32.mxu0 0.0
    %251 = vmatmul.mubr.f32.gmra.mrb[0].mxu0 %v104
    %v252 = vpop.f32.mrb[0].mxu0
    %v253 = vadd.f32 %v93, %v252
    %v254 = vpop.f32.mrb[0].mxu0
    %v255 = vadd.f32 %v97, %v254
    %256 = vmatprep.mubr.f32.mxu0 0.0
    %257 = vmatmul.mubr.f32.gmra.mrb[0].mxu0 %v107
    %v258 = vpop.f32.mrb[0].mxu0
    %v259 = vadd.f32 %v93, %v258
    %v260 = vpop.f32.mrb[0].mxu0
    %v261 = vadd.f32 %v97, %v260
    %262 = vdwg.mxu0
    %v263 = vmax.f32 %v176, 0.0
    %v264 = vmax.f32 %v178, 0.0
    %v265 = vmax.f32 %v253, 0.0
    %v266 = vmax.f32 %v255, 0.0
    %v267 = vmax.f32 %v182, 0.0
    %v268 = vmax.f32 %v184, 0.0
    %v269 = vmax.f32 %v259, 0.0
    %v270 = vmax.f32 %v261, 0.0
    %v271 = vld [vmem:[#allocation7] sm:$0xff]
    %v272 = vld [vmem:[#allocation7 + $0x8] sm:$0xff]
    %v273 = vld [vmem:[#allocation7 + $0x10] sm:$0xff]
    %v274 = vld [vmem:[#allocation7 + $0x18] sm:$0xff]
    %v275 = vld [vmem:[#allocation7 + $0x20] sm:$0xff]
    %v276 = vld [vmem:[#allocation7 + $0x28] sm:$0xff]
    %v277 = vld [vmem:[#allocation7 + $0x30] sm:$0xff]
    %v278 = vld [vmem:[#allocation7 + $0x38] sm:$0xff]
    %v279 = vld [vmem:[#allocation7 + $0x40] sm:$0xff]
    %v280 = vld [vmem:[#allocation7 + $0x48] sm:$0xff]
    %v281 = vld [vmem:[#allocation7 + $0x50] sm:$0xff]
    %v282 = vld [vmem:[#allocation7 + $0x58] sm:$0xff]
    %v283 = vld [vmem:[#allocation7 + $0x60] sm:$0xff]
    %v284 = vld [vmem:[#allocation7 + $0x68] sm:$0xff]
    %v285 = vld [vmem:[#allocation7 + $0x70] sm:$0xff]
    %v286 = vld [vmem:[#allocation7 + $0x78] sm:$0xff]
    %v287 = vld [vmem:[#allocation7 + $0x80] sm:$0xff]
    %v288 = vld [vmem:[#allocation7 + $0x88] sm:$0xff]
    %v289 = vld [vmem:[#allocation7 + $0x90] sm:$0xff]
    %v290 = vld [vmem:[#allocation7 + $0x98] sm:$0xff]
    %v291 = vld [vmem:[#allocation7 + $0xa0] sm:$0xff]
    %v292 = vld [vmem:[#allocation7 + $0xa8] sm:$0xff]
    %v293 = vld [vmem:[#allocation7 + $0xb0] sm:$0xff]
    %v294 = vld [vmem:[#allocation7 + $0xb8] sm:$0xff]
    %v295 = vld [vmem:[#allocation7 + $0xc0] sm:$0xff]
    %v296 = vld [vmem:[#allocation7 + $0xc8] sm:$0xff]
    %v297 = vld [vmem:[#allocation7 + $0xd0] sm:$0xff]
    %v298 = vld [vmem:[#allocation7 + $0xd8] sm:$0xff]
    %v299 = vld [vmem:[#allocation7 + $0xe0] sm:$0xff]
    %v300 = vld [vmem:[#allocation7 + $0xe8] sm:$0xff]
    %v301 = vld [vmem:[#allocation7 + $0xf0] sm:$0xff]
    %v302 = vld [vmem:[#allocation7 + $0xf8] sm:$0xff]
    %v303 = vld [vmem:[#allocation7 + $0x100] sm:$0xff]
    %v304 = vld [vmem:[#allocation7 + $0x108] sm:$0xff]
    %v305 = vld [vmem:[#allocation7 + $0x110] sm:$0xff]
    %v306 = vld [vmem:[#allocation7 + $0x118] sm:$0xff]
    %v307 = vld [vmem:[#allocation7 + $0x120] sm:$0xff]
    %v308 = vld [vmem:[#allocation7 + $0x128] sm:$0xff]
    %v309 = vld [vmem:[#allocation7 + $0x130] sm:$0xff]
    %v310 = vld [vmem:[#allocation7 + $0x138] sm:$0xff]
    %v311 = vld [vmem:[#allocation7 + $0x140] sm:$0xff]
    %v312 = vld [vmem:[#allocation7 + $0x148] sm:$0xff]
    %v313 = vld [vmem:[#allocation7 + $0x150] sm:$0xff]
    %v314 = vld [vmem:[#allocation7 + $0x158] sm:$0xff]
    %v315 = vld [vmem:[#allocation7 + $0x160] sm:$0xff]
    %v316 = vld [vmem:[#allocation7 + $0x168] sm:$0xff]
    %v317 = vld [vmem:[#allocation7 + $0x170] sm:$0xff]
    %v318 = vld [vmem:[#allocation7 + $0x178] sm:$0xff]
    %v319 = vld [vmem:[#allocation7 + $0x180] sm:$0xff]
    %v320 = vld [vmem:[#allocation7 + $0x188] sm:$0xff]
    %v321 = vld [vmem:[#allocation7 + $0x190] sm:$0xff]
    %v322 = vld [vmem:[#allocation7 + $0x198] sm:$0xff]
    %v323 = vld [vmem:[#allocation7 + $0x1a0] sm:$0xff]
    %v324 = vld [vmem:[#allocation7 + $0x1a8] sm:$0xff]
    %v325 = vld [vmem:[#allocation7 + $0x1b0] sm:$0xff]
    %v326 = vld [vmem:[#allocation7 + $0x1b8] sm:$0xff]
    %v327 = vld [vmem:[#allocation7 + $0x1c0] sm:$0xff]
    %v328 = vld [vmem:[#allocation7 + $0x1c8] sm:$0xff]
    %v329 = vld [vmem:[#allocation7 + $0x1d0] sm:$0xff]
    %v330 = vld [vmem:[#allocation7 + $0x1d8] sm:$0xff]
    %v331 = vld [vmem:[#allocation7 + $0x1e0] sm:$0xff]
    %v332 = vld [vmem:[#allocation7 + $0x1e8] sm:$0xff]
    %v333 = vld [vmem:[#allocation7 + $0x1f0] sm:$0xff]
    %v334 = vld [vmem:[#allocation7 + $0x1f8] sm:$0xff]
    %v335 = vld [vmem:[%s4] sm:$0x1]
    %v337 = vlaneseq
    %v338 = vshrl.u32 %v337, 7
    %v339 = vsub.s32 0, %v338
    %v340 = vrot.slane %v335, %v339
    %342 = vmatprep.subr.mxu0 0.0
    %343 = vmatpush1.msra.mxu0 %v271
    %344 = vmatprep.subr.mxu0 0.0
    %345 = vmatpush1.msra.mxu0 %v272
    %346 = vmatprep.subr.mxu0 0.0
    %347 = vmatpush1.msra.mxu0 %v273
    %348 = vmatprep.subr.mxu0 0.0
    %349 = vmatpush1.msra.mxu0 %v274
    %350 = vmatprep.subr.mxu0 0.0
    %351 = vmatpush1.msra.mxu0 %v275
    %352 = vmatprep.subr.mxu0 0.0
    %353 = vmatpush1.msra.mxu0 %v276
    %354 = vmatprep.subr.mxu0 0.0
    %355 = vmatpush1.msra.mxu0 %v277
    %356 = vmatprep.subr.mxu0 0.0
    %357 = vmatpush1.msra.mxu0 %v278
    %358 = vmatprep.subr.mxu0 0.0
    %359 = vmatpush1.msra.mxu0 %v279
    %360 = vmatprep.subr.mxu0 0.0
    %361 = vmatpush1.msra.mxu0 %v280
    %362 = vmatprep.subr.mxu0 0.0
    %363 = vmatpush1.msra.mxu0 %v281
    %364 = vmatprep.subr.mxu0 0.0
    %365 = vmatpush1.msra.mxu0 %v282
    %366 = vmatprep.subr.mxu0 0.0
    %367 = vmatpush1.msra.mxu0 %v283
    %368 = vmatprep.subr.mxu0 0.0
    %369 = vmatpush1.msra.mxu0 %v284
    %370 = vmatprep.subr.mxu0 0.0
    %371 = vmatpush1.msra.mxu0 %v285
    %372 = vmatprep.subr.mxu0 0.0
    %373 = vmatpush1.msra.mxu0 %v286
    %374 = vmatprep.subr.mxu0 0.0
    %375 = vmatpush1.msra.mxu0 %v287
    %376 = vmatprep.subr.mxu0 0.0
    %377 = vmatpush1.msra.mxu0 %v288
    %378 = vmatprep.subr.mxu0 0.0
    %379 = vmatpush1.msra.mxu0 %v289
    %380 = vmatprep.subr.mxu0 0.0
    %381 = vmatpush1.msra.mxu0 %v290
    %382 = vmatprep.subr.mxu0 0.0
    %383 = vmatpush1.msra.mxu0 %v291
    %384 = vmatprep.subr.mxu0 0.0
    %385 = vmatpush1.msra.mxu0 %v292
    %386 = vmatprep.subr.mxu0 0.0
    %387 = vmatpush1.msra.mxu0 %v293
    %388 = vmatprep.subr.mxu0 0.0
    %389 = vmatpush1.msra.mxu0 %v294
    %390 = vmatprep.subr.mxu0 0.0
    %391 = vmatpush1.msra.mxu0 %v295
    %392 = vmatprep.subr.mxu0 0.0
    %393 = vmatpush1.msra.mxu0 %v296
    %394 = vmatprep.subr.mxu0 0.0
    %395 = vmatpush1.msra.mxu0 %v297
    %396 = vmatprep.subr.mxu0 0.0
    %397 = vmatpush1.msra.mxu0 %v298
    %398 = vmatprep.subr.mxu0 0.0
    %399 = vmatpush1.msra.mxu0 %v299
    %400 = vmatprep.subr.mxu0 0.0
    %401 = vmatpush1.msra.mxu0 %v300
    %402 = vmatprep.subr.mxu0 0.0
    %403 = vmatpush1.msra.mxu0 %v301
    %404 = vmatprep.subr.mxu0 0.0
    %405 = vmatpush1.msra.mxu0 %v302
    %406 = vmatprep.mubr.f32.mxu0 %v264
    %407 = vmatmul.mubr.f32.gmra.mrb[0].mxu0 %v263
    %v408 = vpop.f32.mrb[0].mxu0
    %v409 = vadd.f32 %v340, %v408
    %v410 = vpop.f32.mrb[0].mxu0
    %411 = vmatprep.mubr.f32.mxu0 %v268
    %412 = vmatmul.mubr.f32.gmra.mrb[0].mxu0 %v267
    %v413 = vpop.f32.mrb[0].mxu0
    %v414 = vadd.f32 %v340, %v413
    %v415 = vpop.f32.mrb[0].mxu0
    %416 = vdwg.mxu0
    %417 = vmatprep.subr.mxu0 0.0
    %418 = vmatpush1.msra.mxu0 %v303
    %419 = vmatprep.subr.mxu0 0.0
    %420 = vmatpush1.msra.mxu0 %v304
    %421 = vmatprep.subr.mxu0 0.0
    %422 = vmatpush1.msra.mxu0 %v305
    %423 = vmatprep.subr.mxu0 0.0
    %424 = vmatpush1.msra.mxu0 %v306
    %425 = vmatprep.subr.mxu0 0.0
    %426 = vmatpush1.msra.mxu0 %v307
    %427 = vmatprep.subr.mxu0 0.0
    %428 = vmatpush1.msra.mxu0 %v308
    %429 = vmatprep.subr.mxu0 0.0
    %430 = vmatpush1.msra.mxu0 %v309
    %431 = vmatprep.subr.mxu0 0.0
    %432 = vmatpush1.msra.mxu0 %v310
    %433 = vmatprep.subr.mxu0 0.0
    %434 = vmatpush1.msra.mxu0 %v311
    %435 = vmatprep.subr.mxu0 0.0
    %436 = vmatpush1.msra.mxu0 %v312
    %437 = vmatprep.subr.mxu0 0.0
    %438 = vmatpush1.msra.mxu0 %v313
    %439 = vmatprep.subr.mxu0 0.0
    %440 = vmatpush1.msra.mxu0 %v314
    %441 = vmatprep.subr.mxu0 0.0
    %442 = vmatpush1.msra.mxu0 %v315
    %443 = vmatprep.subr.mxu0 0.0
    %444 = vmatpush1.msra.mxu0 %v316
    %445 = vmatprep.subr.mxu0 0.0
    %446 = vmatpush1.msra.mxu0 %v317
    %447 = vmatprep.subr.mxu0 0.0
    %448 = vmatpush1.msra.mxu0 %v318
    %449 = vmatprep.subr.mxu0 0.0
    %450 = vmatpush1.msra.mxu0 %v319
    %451 = vmatprep.subr.mxu0 0.0
    %452 = vmatpush1.msra.mxu0 %v320
    %453 = vmatprep.subr.mxu0 0.0
    %454 = vmatpush1.msra.mxu0 %v321
    %455 = vmatprep.subr.mxu0 0.0
    %456 = vmatpush1.msra.mxu0 %v322
    %457 = vmatprep.subr.mxu0 0.0
    %458 = vmatpush1.msra.mxu0 %v323
    %459 = vmatprep.subr.mxu0 0.0
    %460 = vmatpush1.msra.mxu0 %v324
    %461 = vmatprep.subr.mxu0 0.0
    %462 = vmatpush1.msra.mxu0 %v325
    %463 = vmatprep.subr.mxu0 0.0
    %464 = vmatpush1.msra.mxu0 %v326
    %465 = vmatprep.subr.mxu0 0.0
    %466 = vmatpush1.msra.mxu0 %v327
    %467 = vmatprep.subr.mxu0 0.0
    %468 = vmatpush1.msra.mxu0 %v328
    %469 = vmatprep.subr.mxu0 0.0
    %470 = vmatpush1.msra.mxu0 %v329
    %471 = vmatprep.subr.mxu0 0.0
    %472 = vmatpush1.msra.mxu0 %v330
    %473 = vmatprep.subr.mxu0 0.0
    %474 = vmatpush1.msra.mxu0 %v331
    %475 = vmatprep.subr.mxu0 0.0
    %476 = vmatpush1.msra.mxu0 %v332
    %477 = vmatprep.subr.mxu0 0.0
    %478 = vmatpush1.msra.mxu0 %v333
    %479 = vmatprep.subr.mxu0 0.0
    %480 = vmatpush1.msra.mxu0 %v334
    %481 = vmatprep.mubr.f32.mxu0 %v266
    %482 = vmatmul.mubr.f32.gmra.mrb[0].mxu0 %v265
    %v483 = vpop.f32.mrb[0].mxu0
    %v484 = vadd.f32 %v409, %v483
    %v485 = vpop.f32.mrb[0].mxu0
    %486 = vmatprep.mubr.f32.mxu0 %v270
    %487 = vmatmul.mubr.f32.gmra.mrb[0].mxu0 %v269
    %v488 = vpop.f32.mrb[0].mxu0
    %v489 = vadd.f32 %v414, %v488
    %v490 = vpop.f32.mrb[0].mxu0
    %491 = vdwg.mxu0
    %492 = vst [vmem:[#allocation8] sm:$0xff] %v484
    %493 = vst [vmem:[#allocation8 + $0x8] sm:$0xff] %v489
    // Predicated region
    $region34: #{tpu_custom_call.1} parent=1 // pred_check
      _
    $region35: #{tpu_custom_call.1} parent=1 // pred_check_branch
      %495 = sbr.rel (0) target = $region37
    $region36: #{tpu_custom_call.1} parent=1 // pred_region
      %s497 = ssub.s32 256, 256
      %498 = vsyncadd [#allocation4], %s497
      %s499 = sshll.u32 [#allocation8], 4
      %s500 = int_to_ptr.vmem [resolvable:$true] %s499
      %505 = dma.vmem_to_hbm [thread:$0]  %s500, 256, %s5, [#allocation4], 128, 128, 8
    $region37: #{tpu_custom_call.1} parent=1 // pred_fallthru
      _
    // Predicated region
    $region38: #{tpu_custom_call.1} parent=1 // pred_check
      _
    $region39: #{tpu_custom_call.1} parent=1 // pred_check_branch
      %507 = sbr.rel (0) target = $region41
    $region40: #{tpu_custom_call.1} parent=1 // pred_region
      %508 = dma.done [#allocation4], 256
    $region41: #{tpu_custom_call.1} parent=1 // pred_fallthru
      _
    %509 = vsyncpa [#allocation3], 1
    %510 = vsyncpa [#allocation6], 1
    %511 = vsyncpa [#allocation4], 1

</llo_original>
